<compile_context>
chip_gen: v5e
topology: v5e:2x2
jax: 0.10.0
libtpu: 0.0.40
codegen_flags: <defaults>
</compile_context>

<pallas_src>
import jax
import jax.numpy as jnp
import numpy as np
from jax import lax
from jax.experimental import pallas as pl
from jax.experimental.pallas import tpu as pltpu

# Problem sizes consistent with ConvBlock2D(input_channels=4, output_channels=8)
N, CIN, COUT, H, W = 2, 4, 8, 16, 16
KH = KW = 3
EPS = 1e-5            # nn.BatchNorm2d default
NEG_SLOPE = 0.01      # nn.LeakyReLU default
LANES = W * COUT              # 128  -> exactly one vreg lane width
KDIM = KH * (W + 2) * CIN     # 216  -> contraction dim of the fused matmul


def conv_bn_lrelu_kernel(lhs_ref, w_ref, gb_ref, out_ref):
    # ---- Conv2d 3x3 (pad pre-applied) as ONE MXU matmul, lane-dense result ----
    # (N*H, 216) @ (216, W*COUT) -> (N*H, 128)
    y = jnp.dot(lhs_ref[...], w_ref[...], preferred_element_type=jnp.float32)

    # ---- BatchNorm2d (training mode: batch mean, biased var), one-pass stats ----
    s = jnp.sum(y, axis=0, keepdims=True)         # (1, 128) sublane reduce
    sq = jnp.sum(y * y, axis=0, keepdims=True)    # (1, 128)
    # Same-channel lanes sit at stride COUT=8; sum them with an XLU roll tree.
    # After shifts 64/32/16/8 every lane i holds the total of its channel (i % 8).
    for shift in (64, 32, 16, 8):
        s = s + pltpu.roll(s, shift, 1)
        sq = sq + pltpu.roll(sq, shift, 1)
    inv_n = 1.0 / float(N * H * W)
    mean = s * inv_n
    var = sq * inv_n - mean * mean

    # Folded BN: y*scale + shift  (rsqrt goes to the EUP slot)
    scale = gb_ref[0:1, :] * lax.rsqrt(var + EPS)     # gamma row (pre-tiled)
    shift_v = gb_ref[1:2, :] - mean * scale           # beta  row (pre-tiled)
    z = y * scale + shift_v

    # ---- LeakyReLU as a single max; one dense unmasked store ----
    out_ref[...] = jnp.maximum(z, NEG_SLOPE * z)


def _build_banded_weight(w1_oihw):
    """(COUT, CIN, 3, 3) OIHW -> (KDIM, W*COUT) block-Toeplitz matrix so that the
    whole 3x3 conv over one padded row-triple is a single matmul (built once in
    the wrapper with plain JAX; zero in-kernel cost)."""
    w1_hwio = jnp.transpose(w1_oihw, (2, 3, 1, 0)).astype(jnp.float32)  # (3,3,CIN,COUT)
    blocks = []
    for dy in range(KH):
        piece = w1_hwio[dy].reshape(KW * CIN, COUT)                     # (12, COUT)
        cols = [jnp.pad(piece, ((wp * CIN, (W + 2 - KW - wp) * CIN), (0, 0)))
                for wp in range(W)]
        blocks.append(jnp.concatenate(cols, axis=1))                    # ((W+2)*CIN, W*COUT)
    return jnp.concatenate(blocks, axis=0)                              # (216, 128)


def conv_block_2d(x_nchw, w1_oihw, gamma, beta):
    """PyTorch ConvBlock2D forward (training-mode BN). Input/output in NCHW."""
    x_nhwc = jnp.transpose(x_nchw, (0, 2, 3, 1)).astype(jnp.float32)
    xpad = jnp.pad(x_nhwc, ((0, 0), (1, 1), (1, 1), (0, 0)))            # (N, H+2, W+2, CIN)
    xrow = xpad.reshape(N, H + 2, (W + 2) * CIN)                        # (N, H+2, 72)
    # im2col over full image rows, hoisted to the wrapper (no in-kernel slicing):
    lhs = jnp.concatenate([xrow[:, dy:dy + H, :] for dy in range(KH)], axis=-1)
    lhs = lhs.reshape(N * H, KDIM)                                      # (32, 216)

    wmat = _build_banded_weight(w1_oihw)                                # (216, 128)

    # gamma/beta pre-tiled to the lane-dense channel layout; one consolidated input.
    gb = jnp.stack([jnp.tile(gamma.astype(jnp.float32), W),
                    jnp.tile(beta.astype(jnp.float32), W)], axis=0)     # (2, 128)

    vmem = pl.BlockSpec(memory_space=pltpu.MemorySpace.VMEM)
    out = pl.pallas_call(
        conv_bn_lrelu_kernel,
        out_shape=jax.ShapeDtypeStruct((N * H, LANES), jnp.float32),    # lane-dense slab
        in_specs=[vmem, vmem, vmem],
        out_specs=vmem,
        # No grid: ~50 KB resident in VMEM, far under the 32 MiB scoped default on
        # every generation (v5e/v6e/v7x).  TODO(synk): if scaled to larger N/H/W/C,
        # add a grid with BlockSpecs sized for v7x's 64 MiB VMEM and a two-pass
        # cross-tile BN reduction (batch stats couple all tiles).
    )(lhs, wmat, gb)

    # Layout plumbing back to NCHW in the wrapper.
    return jnp.transpose(out.reshape(N, H, W, COUT), (0, 3, 1, 2))


def reference(x, w1, gamma, beta):
    """Pure-JAX reference matching PyTorch training-mode forward semantics."""
    c = lax.conv_general_dilated(x, w1, (1, 1), ((1, 1), (1, 1)),
                                 dimension_numbers=('NCHW', 'OIHW', 'NCHW'))
    m = jnp.mean(c, axis=(0, 2, 3), keepdims=True)
    v = jnp.mean((c - m) ** 2, axis=(0, 2, 3), keepdims=True)
    y = (c - m) / jnp.sqrt(v + EPS) * gamma.reshape(1, -1, 1, 1) + beta.reshape(1, -1, 1, 1)
    return jnp.where(y > 0, y, NEG_SLOPE * y)


if __name__ == "__main__":
    key = jax.random.PRNGKey(0)
    kx, kw, kg, kb = jax.random.split(key, 4)

    x = jax.random.normal(kx, (N, CIN, H, W), jnp.float32)               # NCHW
    w1 = 0.1 * jax.random.normal(kw, (COUT, CIN, KH, KW), jnp.float32)   # OIHW
    gamma = 1.0 + 0.1 * jax.random.normal(kg, (COUT,), jnp.float32)
    beta = 0.1 * jax.random.normal(kb, (COUT,), jnp.float32)

    out = jax.jit(conv_block_2d)(x, w1, gamma, beta)
    out = jax.block_until_ready(out)

    ref = jax.block_until_ready(reference(x, w1, gamma, beta))
    assert out.shape == (N, COUT, H, W), out.shape
    np.testing.assert_allclose(np.asarray(out), np.asarray(ref), rtol=1e-4, atol=1e-4)

    print("KERNEL_OK")
</pallas_src>

<mosaic_0001>
module attributes {stable_mosaic.version = 11 : i64} {
  func.func @conv_bn_lrelu_kernel(%arg0: memref<32x216xf32, #tpu.memory_space<vmem>>, %arg1: memref<216x128xf32, #tpu.memory_space<vmem>>, %arg2: memref<2x128xf32, #tpu.memory_space<vmem>>, %arg3: memref<32x128xf32, #tpu.memory_space<vmem>>) attributes {dimension_semantics = [], scalar_prefetch = 0 : i64, scratch_operands = 0 : i64, tpu.core_type = #tpu.core_type<tc>} {
    %c0 = arith.constant 0 : index
    %c0_0 = arith.constant 0 : index
    %0 = vector.load %arg0[%c0, %c0_0] : memref<32x216xf32, #tpu.memory_space<vmem>>, vector<32x216xf32>
    %c0_1 = arith.constant 0 : index
    %c0_2 = arith.constant 0 : index
    %1 = vector.load %arg1[%c0_1, %c0_2] : memref<216x128xf32, #tpu.memory_space<vmem>>, vector<216x128xf32>
    %cst = arith.constant dense<0.000000e+00> : vector<32x128xf32>
    %2 = tpu.matmul %0, %1, %cst {dimension_numbers = #tpu.dot_dimension_numbers<[1], [0], [0], [1], [0, 0, 1, 1], [], []>} : vector<32x216xf32>, vector<216x128xf32>, vector<32x128xf32> -> vector<32x128xf32>
    %cst_3 = arith.constant dense<0.000000e+00> : vector<128xf32>
    %3 = vector.multi_reduction <add>, %2, %cst_3 [0] : vector<32x128xf32> to vector<128xf32>
    %4 = vector.shape_cast %3 : vector<128xf32> to vector<1x128xf32>
    %5 = arith.mulf %2, %2 : vector<32x128xf32>
    %cst_4 = arith.constant dense<0.000000e+00> : vector<128xf32>
    %6 = vector.multi_reduction <add>, %5, %cst_4 [0] : vector<32x128xf32> to vector<128xf32>
    %7 = vector.shape_cast %6 : vector<128xf32> to vector<1x128xf32>
    %c64_i32 = arith.constant 64 : i32
    %8 = tpu.dynamic_rotate %4 by %c64_i32 dim 1 : vector<1x128xf32>, i32 -> vector<1x128xf32>
    %9 = arith.addf %4, %8 : vector<1x128xf32>
    %c64_i32_5 = arith.constant 64 : i32
    %10 = tpu.dynamic_rotate %7 by %c64_i32_5 dim 1 : vector<1x128xf32>, i32 -> vector<1x128xf32>
    %11 = arith.addf %7, %10 : vector<1x128xf32>
    %c32_i32 = arith.constant 32 : i32
    %12 = tpu.dynamic_rotate %9 by %c32_i32 dim 1 : vector<1x128xf32>, i32 -> vector<1x128xf32>
    %13 = arith.addf %9, %12 : vector<1x128xf32>
    %c32_i32_6 = arith.constant 32 : i32
    %14 = tpu.dynamic_rotate %11 by %c32_i32_6 dim 1 : vector<1x128xf32>, i32 -> vector<1x128xf32>
    %15 = arith.addf %11, %14 : vector<1x128xf32>
    %c16_i32 = arith.constant 16 : i32
    %16 = tpu.dynamic_rotate %13 by %c16_i32 dim 1 : vector<1x128xf32>, i32 -> vector<1x128xf32>
    %17 = arith.addf %13, %16 : vector<1x128xf32>
    %c16_i32_7 = arith.constant 16 : i32
    %18 = tpu.dynamic_rotate %15 by %c16_i32_7 dim 1 : vector<1x128xf32>, i32 -> vector<1x128xf32>
    %19 = arith.addf %15, %18 : vector<1x128xf32>
    %c8_i32 = arith.constant 8 : i32
    %20 = tpu.dynamic_rotate %17 by %c8_i32 dim 1 : vector<1x128xf32>, i32 -> vector<1x128xf32>
    %21 = arith.addf %17, %20 : vector<1x128xf32>
    %c8_i32_8 = arith.constant 8 : i32
    %22 = tpu.dynamic_rotate %19 by %c8_i32_8 dim 1 : vector<1x128xf32>, i32 -> vector<1x128xf32>
    %23 = arith.addf %19, %22 : vector<1x128xf32>
    %cst_9 = arith.constant 0.001953125 : f32
    %24 = vector.broadcast %cst_9 : f32 to vector<1x128xf32>
    %25 = arith.mulf %21, %24 : vector<1x128xf32>
    %cst_10 = arith.constant 0.001953125 : f32
    %26 = vector.broadcast %cst_10 : f32 to vector<1x128xf32>
    %27 = arith.mulf %23, %26 : vector<1x128xf32>
    %28 = arith.mulf %25, %25 : vector<1x128xf32>
    %29 = arith.subf %27, %28 : vector<1x128xf32>
    %c0_11 = arith.constant 0 : index
    %c0_12 = arith.constant 0 : index
    %30 = vector.load %arg2[%c0_11, %c0_12] : memref<2x128xf32, #tpu.memory_space<vmem>>, vector<1x128xf32>
    %cst_13 = arith.constant 9.99999974E-6 : f32
    %31 = vector.broadcast %cst_13 : f32 to vector<1x128xf32>
    %32 = arith.addf %29, %31 : vector<1x128xf32>
    %33 = math.rsqrt %32 : vector<1x128xf32>
    %34 = arith.mulf %30, %33 : vector<1x128xf32>
    %c1 = arith.constant 1 : index
    %c0_14 = arith.constant 0 : index
    %35 = vector.load %arg2[%c1, %c0_14] : memref<2x128xf32, #tpu.memory_space<vmem>>, vector<1x128xf32>
    %36 = arith.mulf %25, %34 : vector<1x128xf32>
    %37 = arith.subf %35, %36 : vector<1x128xf32>
    %38 = vector.broadcast %34 : vector<1x128xf32> to vector<32x128xf32>
    %39 = arith.mulf %2, %38 : vector<32x128xf32>
    %40 = vector.broadcast %37 : vector<1x128xf32> to vector<32x128xf32>
    %41 = arith.addf %39, %40 : vector<32x128xf32>
    %cst_15 = arith.constant 0.00999999977 : f32
    %42 = vector.broadcast %cst_15 : f32 to vector<32x128xf32>
    %43 = arith.mulf %42, %41 : vector<32x128xf32>
    %44 = arith.maximumf %41, %43 : vector<32x128xf32>
    %c0_16 = arith.constant 0 : index
    %c0_17 = arith.constant 0 : index
    %45 = vector.load %arg3[%c0_16, %c0_17] : memref<32x128xf32, #tpu.memory_space<vmem>>, vector<32x128xf32>
    tpu.vector_store %arg3[%c0_16, %c0_17], %44 {strides = array<i32>} : memref<32x128xf32, #tpu.memory_space<vmem>>, vector<32x128xf32>,
    return
  }
}

</mosaic_0001>

<llo_original>
// kernel: squeeze.3
$region0: #{squeeze.3}
  %s0 = inlined_call_operand.vmem [shape: f32[1,3,4,8], index: 0, kind: input, shape index: {}]
  %s1 = inlined_call_operand.vmem [shape: f32[12,8], index: 1, kind: output, shape index: {}]
  $region1: #{squeeze.3} parent=0
    #allocation0 [shape = 'u8[12288]{0}', space=vmem, size = 0x3000, scoped, tag = 'scoped mem for input reshape']
    %s3 = ssub.s32 16, 1
    %s4 = scalar_lea.vmem %s0, 8
    %v5 = vld [vmem:[%s4] sm:%s3]
    %s6 = scalar_lea.vmem [#allocation0], 16
    %7 = vst [vmem:[%s6] sm:%s3] %v5
    %s8 = scalar_lea.vmem %s0, 4
    %v9 = vld [vmem:[%s8] sm:%s3]
    %s10 = scalar_lea.vmem [#allocation0], 8
    %11 = vst [vmem:[%s10] sm:%s3] %v9
    %v12 = vld [vmem:[%s0] sm:%s3]
    %13 = vst [vmem:[#allocation0] sm:%s3] %v12
    %v14 = vld [vmem:[#allocation0] sm:$0xf]
    %vm15 = vcmask 64512
    %16 = vst.msk [vmem:[%s1] sm:$0xf] %vm15, %v14
    %s17 = scalar_lea.vmem [#allocation0], 8
    %v18 = vld [vmem:[%s17] sm:$0xf]
    %vm19 = vcmask 64512
    %s20 = scalar_lea.vmem %s1, 4
    %21 = vst.msk [vmem:[%s20] sm:$0xf] %vm19, %v18
    %s22 = scalar_lea.vmem [#allocation0], 16
    %v23 = vld [vmem:[%s22] sm:$0xf]
    %vm24 = vcmask 64512
    %s25 = scalar_lea.vmem %s1, 8
    %26 = vst.msk [vmem:[%s25] sm:$0xf] %vm24, %v23

// kernel: tile.18
$region0: #{tile.18}
  %s0 = inlined_call_operand.vmem [shape: f32[16,8], index: 0, kind: input, shape index: {}]
  %s1 = inlined_call_operand.vmem [shape: f32[1,128], index: 1, kind: output, shape index: {}]
  $region1: #{tile.18} parent=0
    #allocation0 [shape = 'u8[4096]{0}', space=vmem, size = 0x1000, scoped, tag = 'scoped mem for output reshape']
    %v2 = vld [vmem:[%s0] sm:$0x1]
    %vm3 = vcmask 64512
    %4 = vst.msk [vmem:[#allocation0] sm:$0x1] %vm3, %v2
    %s5 = scalar_lea.vmem %s0, 15
    %v6 = vld [vmem:[%s5] sm:$0x1]
    %7 = vrot.lane.b32.xlu0 %v6, 120
    %v8 = vpop.permute.xlu0 %7
    %vm9 = vcmask 1048512
    %10 = vst.msk [vmem:[#allocation0] sm:$0x1] %vm9, %v8
    %s11 = scalar_lea.vmem %s0, 14
    %v12 = vld [vmem:[%s11] sm:$0x1]
    %13 = vrot.lane.b32.xlu0 %v12, 112
    %v14 = vpop.permute.xlu0 %13
    %vm15 = vcmask 982912
    %16 = vst.msk [vmem:[#allocation0] sm:$0x1] %vm15, %v14
    %s17 = scalar_lea.vmem %s0, 13
    %v18 = vld [vmem:[%s17] sm:$0x1]
    %19 = vrot.lane.b32.xlu0 %v18, 104
    %v20 = vpop.permute.xlu0 %19
    %vm21 = vcmask 917312
    %22 = vst.msk [vmem:[#allocation0] sm:$0x1] %vm21, %v20
    %s23 = scalar_lea.vmem %s0, 12
    %v24 = vld [vmem:[%s23] sm:$0x1]
    %25 = vrot.lane.b32.xlu0 %v24, 96
    %v26 = vpop.permute.xlu0 %25
    %vm27 = vcmask 851712
    %28 = vst.msk [vmem:[#allocation0] sm:$0x1] %vm27, %v26
    %s29 = scalar_lea.vmem %s0, 11
    %v30 = vld [vmem:[%s29] sm:$0x1]
    %31 = vrot.lane.b32.xlu0 %v30, 88
    %v32 = vpop.permute.xlu0 %31
    %vm33 = vcmask 786112
    %34 = vst.msk [vmem:[#allocation0] sm:$0x1] %vm33, %v32
    %s35 = scalar_lea.vmem %s0, 10
    %v36 = vld [vmem:[%s35] sm:$0x1]
    %37 = vrot.lane.b32.xlu0 %v36, 80
    %v38 = vpop.permute.xlu0 %37
    %vm39 = vcmask 720512
    %40 = vst.msk [vmem:[#allocation0] sm:$0x1] %vm39, %v38
    %s41 = scalar_lea.vmem %s0, 9
    %v42 = vld [vmem:[%s41] sm:$0x1]
    %43 = vrot.lane.b32.xlu0 %v42, 72
    %v44 = vpop.permute.xlu0 %43
    %vm45 = vcmask 654912
    %46 = vst.msk [vmem:[#allocation0] sm:$0x1] %vm45, %v44
    %s47 = scalar_lea.vmem %s0, 8
    %v48 = vld [vmem:[%s47] sm:$0x1]
    %49 = vrot.lane.b32.xlu0 %v48, 64
    %v50 = vpop.permute.xlu0 %49
    %vm51 = vcmask 589312
    %52 = vst.msk [vmem:[#allocation0] sm:$0x1] %vm51, %v50
    %s53 = scalar_lea.vmem %s0, 7
    %v54 = vld [vmem:[%s53] sm:$0x1]
    %55 = vrot.lane.b32.xlu0 %v54, 56
    %v56 = vpop.permute.xlu0 %55
    %vm57 = vcmask 523712
    %58 = vst.msk [vmem:[#allocation0] sm:$0x1] %vm57, %v56
    %s59 = scalar_lea.vmem %s0, 6
    %v60 = vld [vmem:[%s59] sm:$0x1]
    %61 = vrot.lane.b32.xlu0 %v60, 48
    %v62 = vpop.permute.xlu0 %61
    %vm63 = vcmask 458112
    %64 = vst.msk [vmem:[#allocation0] sm:$0x1] %vm63, %v62
    %s65 = scalar_lea.vmem %s0, 5
    %v66 = vld [vmem:[%s65] sm:$0x1]
    %67 = vrot.lane.b32.xlu0 %v66, 40
    %v68 = vpop.permute.xlu0 %67
    %vm69 = vcmask 392512
    %70 = vst.msk [vmem:[#allocation0] sm:$0x1] %vm69, %v68
    %s71 = scalar_lea.vmem %s0, 4
    %v72 = vld [vmem:[%s71] sm:$0x1]
    %73 = vrot.lane.b32.xlu0 %v72, 32
    %v74 = vpop.permute.xlu0 %73
    %vm75 = vcmask 326912
    %76 = vst.msk [vmem:[#allocation0] sm:$0x1] %vm75, %v74
    %s77 = scalar_lea.vmem %s0, 3
    %v78 = vld [vmem:[%s77] sm:$0x1]
    %79 = vrot.lane.b32.xlu0 %v78, 24
    %v80 = vpop.permute.xlu0 %79
    %vm81 = vcmask 261312
    %82 = vst.msk [vmem:[#allocation0] sm:$0x1] %vm81, %v80
    %s83 = scalar_lea.vmem %s0, 2
    %v84 = vld [vmem:[%s83] sm:$0x1]
    %85 = vrot.lane.b32.xlu0 %v84, 16
    %v86 = vpop.permute.xlu0 %85
    %vm87 = vcmask 195712
    %88 = vst.msk [vmem:[#allocation0] sm:$0x1] %vm87, %v86
    %s89 = scalar_lea.vmem %s0, 1
    %v90 = vld [vmem:[%s89] sm:$0x1]
    %91 = vrot.lane.b32.xlu0 %v90, 8
    %v92 = vpop.permute.xlu0 %91
    %vm93 = vcmask 130112
    %94 = vst.msk [vmem:[#allocation0] sm:$0x1] %vm93, %v92
    %s96 = ssub.s32 2, 1
    %v97 = vld [vmem:[#allocation0] sm:%s96]
    %s99 = ssub.s32 2, 1
    %100 = vst [vmem:[%s1] sm:%s99] %v97

// kernel: tile.13
$region0: #{tile.13}
  #allocation0 [shape = 's32[1]{0}', space=sflag, size = 0x4, scoped, tag = 'scoped memory for tile.13']
  %s0 = inlined_call_operand.vmem [shape: f32[8], index: 0, kind: input, shape index: {}]
  %s1 = inlined_call_operand.vmem [shape: f32[16,8], index: 1, kind: output, shape index: {}]
  // Predicated region
  $region2: #{tile.13} parent=0 // pred_check
    _
  $region3: #{tile.13} parent=0 // pred_check_branch
    %3 = sbr.rel (0) target = $region5
  $region4: #{tile.13} parent=0 // pred_region
    _
  $region5: #{tile.13} parent=0 // pred_fallthru
    _
  %v4 = vld [vmem:[%s0] ss:$0 sm:$0xff]
  %5 = vst [vmem:[%s1] sm:$0xff] %v4
  %s6 = scalar_lea.vmem %s1, 8
  %7 = vst [vmem:[%s6] sm:$0xff] %v4

// kernel: conv_block_2d.1
$region0: #{conv_block_2d.1}
  #allocation0 [shape = 'u32[]', space=smem, size = 0x4, offset = 0x4, fixed_abs, tag = 'smem constant byte address 0x4 - core index']
  #allocation1 [shape = 'u32[72,128]{1,0:T(1,128)}', space=vmem, size = 0x9000, scoped, tag = 'internal scratch']
  %s0 = inlined_call_operand.vmem [shape: f32[32,216], index: 0, kind: input, shape index: {}]
  %s1 = inlined_call_operand.vmem [shape: f32[216,128], index: 1, kind: input, shape index: {}]
  %s2 = inlined_call_operand.vmem [shape: f32[2,128], index: 2, kind: input, shape index: {}]
  %s3 = inlined_call_operand.vmem [shape: f32[32,128], index: 3, kind: output, shape index: {}]
  %s4 = sld [smem:[#allocation0]]
  $region22: #{conv_block_2d.1} parent=0
    _
  %s6 = ssub.s32 1, %s4
  %s7 = scalar_select 0, %s6, %s4
  // Predicated region
  $region2: #{conv_block_2d.1} parent=0 // pred_check
    _
  $region3: #{conv_block_2d.1} parent=0 // pred_check_branch
    %9 = sbr.rel (0) target = $region5
  $region4: #{conv_block_2d.1} parent=0 // pred_region
    _
  $region5: #{conv_block_2d.1} parent=0 // pred_fallthru
    _
  // Predicated region
  $region6: #{conv_block_2d.1} parent=0 // pred_check
    _
  $region7: #{conv_block_2d.1} parent=0 // pred_check_branch
    %11 = sbr.rel (0) target = $region9
  $region8: #{conv_block_2d.1} parent=0 // pred_region
    _
  $region9: #{conv_block_2d.1} parent=0 // pred_fallthru
    _
  // Predicated region
  $region10: #{conv_block_2d.1} parent=0 // pred_check
    _
  $region11: #{conv_block_2d.1} parent=0 // pred_check_branch
    %13 = sbr.rel (0) target = $region13
  $region12: #{conv_block_2d.1} parent=0 // pred_region
    _
  $region13: #{conv_block_2d.1} parent=0 // pred_fallthru
    _
  %v14 = vld [vmem:[%s0] sm:$0xff]
  %v15 = vld [vmem:[%s0 + $0x8] sm:$0xff]
  %v16 = vld [vmem:[%s0 + $0x10] sm:$0xff]
  %v17 = vld [vmem:[%s0 + $0x18] sm:$0xff]
  %v18 = vld [vmem:[%s0 + $0x20] sm:$0xff]
  %v19 = vld [vmem:[%s0 + $0x28] sm:$0xff]
  %v20 = vld [vmem:[%s0 + $0x30] sm:$0xff]
  %v21 = vld [vmem:[%s0 + $0x38] sm:$0xff]
  %v22 = vld [vmem:[%s1] sm:$0xff]
  %v23 = vld [vmem:[%s1 + $0x8] sm:$0xff]
  %v24 = vld [vmem:[%s1 + $0x10] sm:$0xff]
  %v25 = vld [vmem:[%s1 + $0x18] sm:$0xff]
  %v26 = vld [vmem:[%s1 + $0x20] sm:$0xff]
  %v27 = vld [vmem:[%s1 + $0x28] sm:$0xff]
  %v28 = vld [vmem:[%s1 + $0x30] sm:$0xff]
  %v29 = vld [vmem:[%s1 + $0x38] sm:$0xff]
  %v30 = vld [vmem:[%s1 + $0x40] sm:$0xff]
  %v31 = vld [vmem:[%s1 + $0x48] sm:$0xff]
  %v32 = vld [vmem:[%s1 + $0x50] sm:$0xff]
  %v33 = vld [vmem:[%s1 + $0x58] sm:$0xff]
  %v34 = vld [vmem:[%s1 + $0x60] sm:$0xff]
  %v35 = vld [vmem:[%s1 + $0x68] sm:$0xff]
  %v36 = vld [vmem:[%s1 + $0x70] sm:$0xff]
  %v37 = vld [vmem:[%s1 + $0x78] sm:$0xff]
  %v38 = vld [vmem:[%s1 + $0x80] sm:$0xff]
  %v39 = vld [vmem:[%s1 + $0x88] sm:$0xff]
  %v40 = vld [vmem:[%s1 + $0x90] sm:$0xff]
  %v41 = vld [vmem:[%s1 + $0x98] sm:$0xff]
  %v42 = vld [vmem:[%s1 + $0xa0] sm:$0xff]
  %v43 = vld [vmem:[%s1 + $0xa8] sm:$0xff]
  %v44 = vld [vmem:[%s1 + $0xb0] sm:$0xff]
  %v45 = vld [vmem:[%s1 + $0xb8] sm:$0xff]
  %v46 = vld [vmem:[%s1 + $0xc0] sm:$0xff]
  %v47 = vld [vmem:[%s1 + $0xc8] sm:$0xff]
  %v48 = vld [vmem:[%s1 + $0xd0] sm:$0xff]
  %vm49 = vcmask 719872
  %v51 = vsel %vm49, %v15, 0
  %v54 = vsel %vm49, %v17, 0
  %v57 = vsel %vm49, %v19, 0
  %v60 = vsel %vm49, %v21, 0
  %62 = vmatpush.msra.mxu0 %v37
  %63 = vmatpush.msra.mxu0 %v36
  %64 = vmatpush.msra.mxu0 %v35
  %65 = vmatpush.msra.mxu0 %v34
  %66 = vmatpush.msra.mxu0 %v33
  %67 = vmatpush.msra.mxu0 %v32
  %68 = vmatpush.msra.mxu0 %v31
  %69 = vmatpush.msra.mxu0 %v30
  %70 = vmatpush.msra.mxu0 %v29
  %71 = vmatpush.msra.mxu0 %v28
  %72 = vmatpush.msra.mxu0 %v27
  %73 = vmatpush.msra.mxu0 %v26
  %74 = vmatpush.msra.mxu0 %v25
  %75 = vmatpush.msra.mxu0 %v24
  %76 = vmatpush.msra.mxu0 %v23
  %77 = vmatpush.msra.mxu0 %v22
  %78 = vmatmul.f32.gmra.mxu0 %v14
  %v79 = vpop.f32.mrf.mxu0
  %v80 = vadd.f32 0.0, %v79
  %81 = vmatmul.f32.gmra.mxu0 %v16
  %v82 = vpop.f32.mrf.mxu0
  %v83 = vadd.f32 0.0, %v82
  %84 = vmatmul.f32.gmra.mxu0 %v18
  %v85 = vpop.f32.mrf.mxu0
  %v86 = vadd.f32 0.0, %v85
  %87 = vmatmul.f32.gmra.mxu0 %v20
  %v88 = vpop.f32.mrf.mxu0
  %v89 = vadd.f32 0.0, %v88
  %90 = vdwg.mxu0
  %91 = vmatpush.msra.mxu0 0.0
  %92 = vmatpush.msra.mxu0 0.0
  %93 = vmatpush.msra.mxu0 0.0
  %94 = vmatpush.msra.mxu0 0.0
  %95 = vmatpush.msra.mxu0 0.0
  %96 = vmatpush.msra.mxu0 %v48
  %97 = vmatpush.msra.mxu0 %v47
  %98 = vmatpush.msra.mxu0 %v46
  %99 = vmatpush.msra.mxu0 %v45
  %100 = vmatpush.msra.mxu0 %v44
  %101 = vmatpush.msra.mxu0 %v43
  %102 = vmatpush.msra.mxu0 %v42
  %103 = vmatpush.msra.mxu0 %v41
  %104 = vmatpush.msra.mxu0 %v40
  %105 = vmatpush.msra.mxu0 %v39
  %106 = vmatpush.msra.mxu0 %v38
  %107 = vmatmul.f32.gmra.mxu0 %v51
  %v108 = vpop.f32.mrf.mxu0
  %v109 = vadd.f32 %v80, %v108
  %110 = vmatmul.f32.gmra.mxu0 %v54
  %v111 = vpop.f32.mrf.mxu0
  %v112 = vadd.f32 %v83, %v111
  %113 = vmatmul.f32.gmra.mxu0 %v57
  %v114 = vpop.f32.mrf.mxu0
  %v115 = vadd.f32 %v86, %v114
  %116 = vmatmul.f32.gmra.mxu0 %v60
  %v117 = vpop.f32.mrf.mxu0
  %v118 = vadd.f32 %v89, %v117
  %119 = vdwg.mxu0
  %v120 = vadd.f32 %v109, %v112
  %v121 = vadd.f32 %v120, %v115
  %v122 = vadd.f32 %v121, %v118
  %v123 = vrot.slane %v122, 4
  %v124 = vadd.f32 %v122, %v123
  %v125 = vrot.slane %v124, 2
  %v126 = vadd.f32 %v124, %v125
  %v127 = vrot.slane %v126, 1
  %v128 = vadd.f32 %v126, %v127
  %v129 = vmul.f32 %v109, %v109
  %v130 = vmul.f32 %v112, %v112
  %v131 = vmul.f32 %v115, %v115
  %v132 = vmul.f32 %v118, %v118
  %v133 = vadd.f32 %v129, %v130
  %v134 = vadd.f32 %v133, %v131
  %v135 = vadd.f32 %v134, %v132
  %v136 = vrot.slane %v135, 4
  %v137 = vadd.f32 %v135, %v136
  %v138 = vrot.slane %v137, 2
  %v139 = vadd.f32 %v137, %v138
  %v140 = vrot.slane %v139, 1
  %v141 = vadd.f32 %v139, %v140
  %142 = vrot.lane.b32.xlu0 %v128, 64
  %v143 = vpop.permute.xlu0 %142
  %v144 = vadd.f32 %v128, %v143
  %145 = vrot.lane.b32.xlu0 %v141, 64
  %v146 = vpop.permute.xlu0 %145
  %v147 = vadd.f32 %v141, %v146
  %148 = vrot.lane.b32.xlu0 %v144, 32
  %v149 = vpop.permute.xlu0 %148
  %v150 = vadd.f32 %v144, %v149
  %151 = vrot.lane.b32.xlu0 %v147, 32
  %v152 = vpop.permute.xlu0 %151
  %v153 = vadd.f32 %v147, %v152
  %154 = vrot.lane.b32.xlu0 %v150, 16
  %v155 = vpop.permute.xlu0 %154
  %v156 = vadd.f32 %v150, %v155
  %157 = vrot.lane.b32.xlu0 %v153, 16
  %v158 = vpop.permute.xlu0 %157
  %v159 = vadd.f32 %v153, %v158
  %160 = vrot.lane.b32.xlu0 %v156, 8
  %v161 = vpop.permute.xlu0 %160
  %v162 = vadd.f32 %v156, %v161
  %163 = vrot.lane.b32.xlu0 %v159, 8
  %v164 = vpop.permute.xlu0 %163
  %v165 = vadd.f32 %v159, %v164
  %v166 = vmul.f32 %v162, 0.001953125
  %v167 = vmul.f32 %v165, 0.001953125
  %v168 = vmul.f32 %v166, %v166
  %v169 = vsub.f32 %v167, %v168
  %v170 = vld [vmem:[%s2] sm:$0x1]
  %v171 = vadd.f32 %v169, 1e-05
  %v172 = vrsqrt.pop %v171
  %v173 = vmul.f32 %v172, %v171
  %v174 = vmul.f32 %v173, %v172
  %v175 = vmul.f32 0.5, %v174
  %v176 = vsub.f32 1.5, %v175
  %v177 = vmul.f32 %v172, %v176
  %vm178 = vweird.f32 %v171
  %vm179 = vweird.f32 %v172
  %vm180 = vmor %vm178, %vm179
  %v181 = vsel %vm180, %v172, %v177
  %v182 = vmul.f32 %v170, %v181
  %v183 = vld [vmem:[%s2 + $0x1] sm:$0x1]
  %v184 = vmul.f32 %v166, %v182
  %v185 = vsub.f32 %v183, %v184
  %v186 = vperm.slane %v182, 0
  %v187 = vmul.f32 %v109, %v186
  %v188 = vmul.f32 %v112, %v186
  %v189 = vmul.f32 %v115, %v186
  %v190 = vmul.f32 %v118, %v186
  %v191 = vperm.slane %v185, 0
  %v192 = vadd.f32 %v187, %v191
  %v193 = vadd.f32 %v188, %v191
  %v194 = vadd.f32 %v189, %v191
  %v195 = vadd.f32 %v190, %v191
  %v196 = vmul.f32 %v192, 0.01
  %v197 = vmul.f32 %v193, 0.01
  %v198 = vmul.f32 %v194, 0.01
  %v199 = vmul.f32 %v195, 0.01
  %v200 = vmax.f32 %v192, %v196
  %v201 = vmax.f32 %v193, %v197
  %v202 = vmax.f32 %v194, %v198
  %v203 = vmax.f32 %v195, %v199
  %204 = vst [vmem:[%s3] sm:$0xff] %v200
  %205 = vst [vmem:[%s3 + $0x8] sm:$0xff] %v201
  %206 = vst [vmem:[%s3 + $0x10] sm:$0xff] %v202
  %207 = vst [vmem:[%s3 + $0x18] sm:$0xff] %v203
  // Predicated region
  $region14: #{conv_block_2d.1} parent=0 // pred_check
    _
  $region15: #{conv_block_2d.1} parent=0 // pred_check_branch
    %209 = sbr.rel (0) target = $region17
  $region16: #{conv_block_2d.1} parent=0 // pred_region
    _
  $region17: #{conv_block_2d.1} parent=0 // pred_fallthru
    _
  // Predicated region
  $region18: #{conv_block_2d.1} parent=0 // pred_check
    _
  $region19: #{conv_block_2d.1} parent=0 // pred_check_branch
    %211 = sbr.rel (0) target = $region21
  $region20: #{conv_block_2d.1} parent=0 // pred_region
    _
  $region21: #{conv_block_2d.1} parent=0 // pred_fallthru
    _

</llo_original>
